<compile_context>
chip_gen: v6e
topology: v6e:2x2x1
jax: 0.10.0
libtpu: 0.0.40
codegen_flags: <defaults>
</compile_context>

<pallas_src>
import jax
import jax.numpy as jnp
from jax.experimental import pallas as pl
from jax.experimental.pallas import tpu as pltpu


def _drop_path_kernel(scale_ref, x_ref, o_ref):
    # scale_ref: (TB, 1) f32 per-sample scale; x_ref / o_ref: (TB, TF) x.dtype.
    # Single broadcast-multiply in the output dtype (bf16 stays bf16 on v6e/v7x).
    o_ref[...] = x_ref[...] * scale_ref[...].astype(o_ref.dtype)


def _keep_mask(key, batch, keep_prob):
    """Per-sample 0/1 keep mask: floor(keep_prob + U[0,1)). Shape (batch,), f32."""
    u = jax.random.uniform(key, (batch,), dtype=jnp.float32)
    return jnp.floor(keep_prob + u)


def _round_up(n, m):
    return ((n + m - 1) // m) * m


# Target lane-tile width: 8 sublanes * 8192 lanes * 4 B = 256 KiB per input
# tile; with in+out double-buffered that's ~1 MiB of VMEM — comfortably inside
# the v7x 32 MiB scoped default while big enough to amortize per-step overhead.
_TF_TARGET = 8192


def drop_path(x, *, drop_prob, key, training=True):
    """Stochastic depth per sample. x: (B, ...) any trailing shape. Returns out (same shape/dtype)."""
    if drop_prob == 0.0 or not training:
        return x
    if drop_prob >= 1.0:
        return jnp.zeros_like(x)  # guard: avoids 0 * inf = NaN

    keep_prob = 1.0 - float(drop_prob)
    B = x.shape[0]
    F = 1
    for d in x.shape[1:]:
        F *= d

    # Per-sample scale precomputed in glue: mask/keep_prob, fed as (B, 1) f32 VMEM input.
    mask = _keep_mask(key, B, keep_prob)
    scale = (mask * (1.0 / keep_prob)).reshape(B, 1).astype(jnp.float32)

    x2 = x.reshape(B, F)

    # Batch (sublane) tile: 8 when possible; full extent for small B (legal block).
    if B % 8 == 0 or B > 8:
        TB = 8
        B_pad = _round_up(B, 8)
    else:
        TB = B
        B_pad = B

    # Feature (lane) tile: multiple of 128 (or full extent when F < 128).
    if F < 128:
        TF = F
        F_pad = F
    else:
        TF = min(_TF_TARGET, _round_up(F, 128))
        F_pad = _round_up(F, TF)

    if B_pad > B or F_pad > F:
        x2 = jnp.pad(x2, ((0, B_pad - B), (0, F_pad - F)))
        scale = jnp.pad(scale, ((0, B_pad - B), (0, 0)))

    grid = (B_pad // TB, F_pad // TF)

    # TODO(synk): for very large F one could skip the input DMA of dropped
    # samples (memory_space=pl.ANY + pl.when(scale != 0)) to cut ~drop_prob of
    # the read traffic; not worth the manual-DMA complexity at these sizes.
    out = pl.pallas_call(
        _drop_path_kernel,
        out_shape=jax.ShapeDtypeStruct((B_pad, F_pad), x.dtype),
        grid=grid,
        in_specs=[
            pl.BlockSpec((TB, 1), lambda i, j: (i, 0)),    # per-sample scale
            pl.BlockSpec((TB, TF), lambda i, j: (i, j)),   # x tile
        ],
        out_specs=pl.BlockSpec((TB, TF), lambda i, j: (i, j)),
        compiler_params=pltpu.CompilerParams(
            dimension_semantics=("parallel", "parallel")),
    )(scale, x2)

    if B_pad > B or F_pad > F:
        out = out[:B, :F]
    return out.reshape(x.shape)


if __name__ == "__main__":
    key = jax.random.PRNGKey(0)
    kx, kmask = jax.random.split(key)

    B, C, H, W = 2, 4, 16, 16
    x = jax.random.normal(kx, (B, C, H, W), dtype=jnp.float32)

    drop_prob = 0.5
    keep_prob = 1.0 - drop_prob

    # Training path (kernel).
    out = jax.block_until_ready(drop_path(x, drop_prob=drop_prob, key=kmask, training=True))

    # Reference with the same per-sample mask (same key/draw as the kernel path).
    mask = _keep_mask(kmask, B, keep_prob)
    ref = x / keep_prob * mask.astype(x.dtype).reshape(B, 1, 1, 1)
    assert out.shape == x.shape and out.dtype == x.dtype
    assert jnp.allclose(out, ref, atol=1e-6, rtol=1e-6)

    # Non-128-aligned feature size -> exercises the padding path.
    x2 = jax.random.normal(kx, (B, 3, 5, 7), dtype=jnp.float32)  # F = 105
    out2 = jax.block_until_ready(drop_path(x2, drop_prob=drop_prob, key=kmask, training=True))
    mask2 = _keep_mask(kmask, B, keep_prob)
    ref2 = x2 / keep_prob * mask2.astype(x2.dtype).reshape(B, 1, 1, 1)
    assert jnp.allclose(out2, ref2, atol=1e-6, rtol=1e-6)

    # Eval path (identity, no kernel launch — matches PyTorch `not self.training`).
    out_eval = jax.block_until_ready(drop_path(x, drop_prob=drop_prob, key=kmask, training=False))
    assert jnp.allclose(out_eval, x)

    # drop_prob == 1.0 guard (all-zeros, no NaN).
    out_all = jax.block_until_ready(drop_path(x, drop_prob=1.0, key=kmask, training=True))
    assert jnp.allclose(out_all, jnp.zeros_like(x))

    print("KERNEL_OK")
</pallas_src>

<mosaic_0001>
module attributes {stable_mosaic.version = 11 : i64} {
  func.func @_drop_path_kernel(%arg0: i32, %arg1: i32, %arg2: memref<2x1xf32, #tpu.memory_space<vmem>>, %arg3: memref<2x1024xf32, #tpu.memory_space<vmem>>, %arg4: memref<2x1024xf32, #tpu.memory_space<vmem>>) attributes {dimension_semantics = [#tpu.dimension_semantics<parallel>, #tpu.dimension_semantics<parallel>], iteration_bounds = array<i64: 1, 1>, scalar_prefetch = 0 : i64, scratch_operands = 0 : i64, tpu.core_type = #tpu.core_type<tc>, window_params = [{transform_indices = @transform_0, window_bounds = array<i64: 2, 1>}, {transform_indices = @transform_1, window_bounds = array<i64: 2, 1024>}, {transform_indices = @transform_2, window_bounds = array<i64: 2, 1024>}]} {
    %c0 = arith.constant 0 : index
    %c0_0 = arith.constant 0 : index
    %0 = vector.load %arg3[%c0, %c0_0] : memref<2x1024xf32, #tpu.memory_space<vmem>>, vector<2x1024xf32>
    %c0_1 = arith.constant 0 : index
    %c0_2 = arith.constant 0 : index
    %1 = vector.load %arg2[%c0_1, %c0_2] : memref<2x1xf32, #tpu.memory_space<vmem>>, vector<2x1xf32>
    %2 = vector.broadcast %1 : vector<2x1xf32> to vector<2x1024xf32>
    %3 = arith.mulf %0, %2 : vector<2x1024xf32>
    %c0_3 = arith.constant 0 : index
    %c0_4 = arith.constant 0 : index
    %4 = vector.load %arg4[%c0_3, %c0_4] : memref<2x1024xf32, #tpu.memory_space<vmem>>, vector<2x1024xf32>
    tpu.vector_store %arg4[%c0_3, %c0_4], %3 {strides = array<i32>} : memref<2x1024xf32, #tpu.memory_space<vmem>>, vector<2x1024xf32>,
    return
  }
  func.func @transform_0(%arg0: i32, %arg1: i32) -> (i32, i32) {
    %c0_i32 = arith.constant 0 : i32
    %c0_i32_0 = arith.constant 0 : i32
    return %arg0, %c0_i32 : i32, i32
  }
  func.func @transform_1(%arg0: i32, %arg1: i32) -> (i32, i32) {
    %c0_i32 = arith.constant 0 : i32
    return %arg0, %arg1 : i32, i32
  }
  func.func @transform_2(%arg0: i32, %arg1: i32) -> (i32, i32) {
    %c0_i32 = arith.constant 0 : i32
    return %arg0, %arg1 : i32, i32
  }
}

</mosaic_0001>

<llo_original>
// kernel: tpu_custom_call.1
$region0: #{tpu_custom_call.1}
  #allocation0 [shape = 'u32[]', space=smem, size = 0x4, offset = 0x4, fixed_abs, tag = 'smem constant byte address 0x4 - core index']
  #allocation1 [shape = 'u32[144,128]{1,0:T(1,128)}', space=vmem, size = 0x12000, scoped, tag = 'internal scratch']
  %s0 = inlined_call_operand.vmem [shape: f32[2,1], index: 0, kind: input, shape index: {}]
  %s1 = inlined_call_operand.hbm [shape: f32[2,1024], index: 1, kind: input, shape index: {}]
  %s2 = inlined_call_operand.hbm [shape: f32[2,1024], index: 2, kind: output, shape index: {}]
  %s3 = sld [smem:[#allocation0]]
  $region22: #{tpu_custom_call.1} parent=0
    _
  %s5 = ssub.s32 1, %s3
  %s6 = scalar_select 0, %s5, %s3
  $region1: #{tpu_custom_call.1} parent=0
    #allocation2 [shape = 'u8[8192]{0}', space=vmem, size = 0x2000, scoped, tag = 'input window, operand 1, single buffered']
    #allocation3 [shape = 's32[1]{0}', space=sflag, size = 0x4, scoped, tag = 'scoped memory for tpu_custom_call.1']
    #allocation4 [shape = 's32[1]{0}', space=sflag, size = 0x4, scoped, tag = 'scoped memory for tpu_custom_call.1']
    #allocation5 [shape = 'u8[8192]{0}', space=vmem, size = 0x2000, scoped, tag = 'output window, operand 0, single buffered']
    %7 = vsyncpa [#allocation3], 0
    %8 = vsyncpa [#allocation4], 0
    // Predicated region
    $region2: #{tpu_custom_call.1} parent=1 // pred_check
      _
    $region3: #{tpu_custom_call.1} parent=1 // pred_check_branch
      %10 = sbr.rel (0) target = $region5
    $region4: #{tpu_custom_call.1} parent=1 // pred_region
      _
    $region5: #{tpu_custom_call.1} parent=1 // pred_fallthru
      _
    // Predicated region
    $region6: #{tpu_custom_call.1} parent=1 // pred_check
      _
    $region7: #{tpu_custom_call.1} parent=1 // pred_check_branch
      %12 = sbr.rel (0) target = $region9
    $region8: #{tpu_custom_call.1} parent=1 // pred_region
      %s14 = ssub.s32 256, 256
      %15 = vsyncadd [#allocation3], %s14
      %s17 = sshll.u32 [#allocation2], 4
      %s18 = int_to_ptr.vmem [resolvable:$true] %s17
      %20 = dma.hbm_to_vmem [thread:$0]  %s1, 256, %s18, [#allocation3]
    $region9: #{tpu_custom_call.1} parent=1 // pred_fallthru
      _
    // Predicated region
    $region10: #{tpu_custom_call.1} parent=1 // pred_check
      _
    $region11: #{tpu_custom_call.1} parent=1 // pred_check_branch
      %22 = sbr.rel (0) target = $region13
    $region12: #{tpu_custom_call.1} parent=1 // pred_region
      %23 = dma.done [#allocation3], 256
    $region13: #{tpu_custom_call.1} parent=1 // pred_fallthru
      _
    %v24 = vld [vmem:[#allocation2] sm:$0xff]
    %v25 = vld [vmem:[#allocation2 + $0x8] sm:$0xff]
    %v26 = vld [vmem:[%s0] sm:$0x3]
    %28 = vset.pattern.permute.xlu0 0
    %29 = vperm.xlu0 %28, %v26
    %v30 = vpop.permute.xlu0 %29
    %v32 = vunpack.c.l.s4 269488144
    %v33 = vunpack.c.0.s8 %v32
    %v34 = vlaneseq
    %v35 = vshrl.u32 %v34, 7
    %v36 = vsub.s32 %v33, %v35
    %v37 = vrot.slane %v30, %v36
    %v39 = vmul.f32 %v24, %v37
    %v40 = vmul.f32 %v25, %v37
    %41 = vst [vmem:[#allocation5] sm:$0xff] %v39
    %42 = vst [vmem:[#allocation5 + $0x8] sm:$0xff] %v40
    // Predicated region
    $region14: #{tpu_custom_call.1} parent=1 // pred_check
      _
    $region15: #{tpu_custom_call.1} parent=1 // pred_check_branch
      %44 = sbr.rel (0) target = $region17
    $region16: #{tpu_custom_call.1} parent=1 // pred_region
      %s46 = ssub.s32 256, 256
      %47 = vsyncadd [#allocation4], %s46
      %s49 = sshll.u32 [#allocation5], 4
      %s50 = int_to_ptr.vmem [resolvable:$true] %s49
      %52 = dma.vmem_to_hbm [thread:$0]  %s50, 256, %s2, [#allocation4]
    $region17: #{tpu_custom_call.1} parent=1 // pred_fallthru
      _
    // Predicated region
    $region18: #{tpu_custom_call.1} parent=1 // pred_check
      _
    $region19: #{tpu_custom_call.1} parent=1 // pred_check_branch
      %54 = sbr.rel (0) target = $region21
    $region20: #{tpu_custom_call.1} parent=1 // pred_region
      %55 = dma.done [#allocation4], 256
    $region21: #{tpu_custom_call.1} parent=1 // pred_fallthru
      _
    %56 = vsyncpa [#allocation3], 1
    %57 = vsyncpa [#allocation4], 1

</llo_original>
